<compile_context>
chip_gen: v5e
topology: v5e:2x2
jax: 0.10.0
libtpu: 0.0.40
codegen_flags: <defaults>
</compile_context>

<pallas_src>
import jax
import jax.numpy as jnp
from jax.experimental import pallas as pl
from jax.experimental.pallas import tpu as pltpu

D_IN, H1, H2, D_OUT = 22, 26, 25, 3
OUT_PAD = 8        # narrow, lane-legal output slab; wrapper slices back to 3
MAX_TB = 8192      # batch tile; (8192,22)+(8192,8) f32 double-buffered << VMEM


def mlp_kernel(x_ref, w_ref, b_ref, o_ref):
    # Single fused affine map; MXU accumulates in f32.
    o_ref[...] = (jnp.dot(x_ref[...], w_ref[...],
                          preferred_element_type=jnp.float32) + b_ref[...])


def _round_up(n, m):
    return ((n + m - 1) // m) * m


def _select_tb(batch, max_tb=MAX_TB):
    # Keep >= 2 grid tiles whenever there is enough work (v7x megacore) and
    # never make the tile (much) larger than the batch itself.
    half = _round_up(pl.cdiv(batch, 2), 8)
    tb = min(max_tb, max(half, 8))
    return min(tb, _round_up(batch, 8))


def prepare_params(params):
    """One-time fold of the activation-free 3-layer chain into (W_eff, b_eff)."""
    (w1, b1), (w2, b2), (w3, b3) = params
    w_eff = w1 @ w2 @ w3                      # (22, 3), f32
    b_eff = (b1 @ w2 + b2) @ w3 + b3          # (1, 3),  f32
    w_eff = jnp.pad(w_eff, ((0, 0), (0, OUT_PAD - D_OUT)))
    b_eff = jnp.pad(b_eff, ((0, 0), (0, OUT_PAD - D_OUT)))
    return w_eff, b_eff


def neural_net_forward(x, prepared, max_tb=MAX_TB):
    """x: (B, 22) float32 -> (B, 3) float32."""
    w_eff, b_eff = prepared
    B = x.shape[0]
    TB = _select_tb(B, max_tb)
    grid = (pl.cdiv(B, TB),)

    resident = lambda a: pl.BlockSpec(a.shape, lambda i: (0, 0))
    out = pl.pallas_call(
        mlp_kernel,
        out_shape=jax.ShapeDtypeStruct((B, OUT_PAD), jnp.float32),
        grid=grid,
        in_specs=[pl.BlockSpec((TB, D_IN), lambda i: (i, 0)),
                  resident(w_eff), resident(b_eff)],
        out_specs=pl.BlockSpec((TB, OUT_PAD), lambda i: (i, 0)),
        compiler_params=pltpu.CompilerParams(
            dimension_semantics=("parallel",)),   # megacore sharding on v7x
    )(x, w_eff, b_eff)

    return out[:, :D_OUT]


def init_params(key):
    """Deterministic init mimicking nn.Linear default (uniform +/- 1/sqrt(fan_in)).
    Weights are built directly in (in, out) layout; biases as (1, out)."""
    ks = jax.random.split(key, 6)

    def linear(kw, kb, fan_in, fan_out):
        bound = 1.0 / jnp.sqrt(jnp.float32(fan_in))
        w = jax.random.uniform(kw, (fan_in, fan_out), jnp.float32, -bound, bound)
        b = jax.random.uniform(kb, (1, fan_out), jnp.float32, -bound, bound)
        return w, b

    return (
        linear(ks[0], ks[1], D_IN, H1),
        linear(ks[2], ks[3], H1, H2),
        linear(ks[4], ks[5], H2, D_OUT),
    )


def reference_forward(x, params):
    (w1, b1), (w2, b2), (w3, b3) = params
    h = x @ w1 + b1
    h = h @ w2 + b2
    return h @ w3 + b3


if __name__ == "__main__":
    key = jax.random.PRNGKey(0)
    k_x, k_p = jax.random.split(key)
    params = init_params(k_p)
    prepared = prepare_params(params)   # one-time fold, outside the hot path

    # Primary check: B = 8 (one full tile).
    B = 8
    x = jax.random.normal(k_x, (B, D_IN), jnp.float32)
    out = jax.block_until_ready(neural_net_forward(x, prepared))
    ref = reference_forward(x, params)
    assert out.shape == (B, D_OUT)
    assert jnp.allclose(out, ref, atol=1e-4, rtol=1e-4)

    # Ragged batch: exercises the cdiv-grid edge block (masked stores).
    B2 = 5
    x2 = jax.random.normal(jax.random.PRNGKey(1), (B2, D_IN), jnp.float32)
    out2 = jax.block_until_ready(neural_net_forward(x2, prepared))
    ref2 = reference_forward(x2, params)
    assert out2.shape == (B2, D_OUT)
    assert jnp.allclose(out2, ref2, atol=1e-4, rtol=1e-4)

    # Multi-tile batch: exercises the parallel grid with two full tiles.
    B3 = 48
    x3 = jax.random.normal(jax.random.PRNGKey(2), (B3, D_IN), jnp.float32)
    out3 = jax.block_until_ready(neural_net_forward(x3, prepared, max_tb=32))
    ref3 = reference_forward(x3, params)
    assert out3.shape == (B3, D_OUT)
    assert jnp.allclose(out3, ref3, atol=1e-4, rtol=1e-4)

    print("KERNEL_OK")
</pallas_src>

<mosaic_0001>
module attributes {stable_mosaic.version = 11 : i64} {
  func.func @mlp_kernel(%arg0: i32, %arg1: memref<8x22xf32, #tpu.memory_space<vmem>>, %arg2: memref<22x8xf32, #tpu.memory_space<vmem>>, %arg3: memref<1x8xf32, #tpu.memory_space<vmem>>, %arg4: memref<8x8xf32, #tpu.memory_space<vmem>>) attributes {dimension_semantics = [#tpu.dimension_semantics<parallel>], iteration_bounds = array<i64: 1>, scalar_prefetch = 0 : i64, scratch_operands = 0 : i64, tpu.core_type = #tpu.core_type<tc>, window_params = [{transform_indices = @transform_0, window_bounds = array<i64: 8, 22>}, {pipeline_mode = #tpu.pipeline_mode<synchronous>, transform_indices = @transform_1, window_bounds = array<i64: 22, 8>}, {pipeline_mode = #tpu.pipeline_mode<synchronous>, transform_indices = @transform_2, window_bounds = array<i64: 1, 8>}, {transform_indices = @transform_3, window_bounds = array<i64: 8, 8>}]} {
    %c0 = arith.constant 0 : index
    %c0_0 = arith.constant 0 : index
    %0 = vector.load %arg1[%c0, %c0_0] : memref<8x22xf32, #tpu.memory_space<vmem>>, vector<8x22xf32>
    %c0_1 = arith.constant 0 : index
    %c0_2 = arith.constant 0 : index
    %1 = vector.load %arg2[%c0_1, %c0_2] : memref<22x8xf32, #tpu.memory_space<vmem>>, vector<22x8xf32>
    %cst = arith.constant dense<0.000000e+00> : vector<8x8xf32>
    %2 = tpu.matmul %0, %1, %cst {dimension_numbers = #tpu.dot_dimension_numbers<[1], [0], [0], [1], [0, 0, 1, 1], [], []>} : vector<8x22xf32>, vector<22x8xf32>, vector<8x8xf32> -> vector<8x8xf32>
    %c0_3 = arith.constant 0 : index
    %c0_4 = arith.constant 0 : index
    %3 = vector.load %arg3[%c0_3, %c0_4] : memref<1x8xf32, #tpu.memory_space<vmem>>, vector<1x8xf32>
    %4 = vector.broadcast %3 : vector<1x8xf32> to vector<8x8xf32>
    %5 = arith.addf %2, %4 : vector<8x8xf32>
    %c0_5 = arith.constant 0 : index
    %c0_6 = arith.constant 0 : index
    %6 = vector.load %arg4[%c0_5, %c0_6] : memref<8x8xf32, #tpu.memory_space<vmem>>, vector<8x8xf32>
    tpu.vector_store %arg4[%c0_5, %c0_6], %5 {strides = array<i32>} : memref<8x8xf32, #tpu.memory_space<vmem>>, vector<8x8xf32>,
    return
  }
  func.func @transform_0(%arg0: i32) -> (i32, i32) {
    %c0_i32 = arith.constant 0 : i32
    %c0_i32_0 = arith.constant 0 : i32
    return %arg0, %c0_i32 : i32, i32
  }
  func.func @transform_1(%arg0: i32) -> (i32, i32) {
    %c0_i32 = arith.constant 0 : i32
    %c0_i32_0 = arith.constant 0 : i32
    %c0_i32_1 = arith.constant 0 : i32
    return %c0_i32, %c0_i32_0 : i32, i32
  }
  func.func @transform_2(%arg0: i32) -> (i32, i32) {
    %c0_i32 = arith.constant 0 : i32
    %c0_i32_0 = arith.constant 0 : i32
    %c0_i32_1 = arith.constant 0 : i32
    return %c0_i32, %c0_i32_0 : i32, i32
  }
  func.func @transform_3(%arg0: i32) -> (i32, i32) {
    %c0_i32 = arith.constant 0 : i32
    %c0_i32_0 = arith.constant 0 : i32
    return %arg0, %c0_i32 : i32, i32
  }
}

</mosaic_0001>

<llo_original>
// kernel: tpu_custom_call.1
$region0: #{tpu_custom_call.1}
  #allocation0 [shape = 'u32[]', space=smem, size = 0x4, offset = 0x4, fixed_abs, tag = 'smem constant byte address 0x4 - core index']
  #allocation1 [shape = 'u32[72,128]{1,0:T(1,128)}', space=vmem, size = 0x9000, scoped, tag = 'internal scratch']
  %s0 = inlined_call_operand.vmem [shape: f32[8,22], index: 0, kind: input, shape index: {}]
  %s1 = inlined_call_operand.vmem [shape: f32[22,8], index: 1, kind: input, shape index: {}]
  %s2 = inlined_call_operand.vmem [shape: f32[1,8], index: 2, kind: input, shape index: {}]
  %s3 = inlined_call_operand.hbm [shape: f32[8,8], index: 3, kind: output, shape index: {}]
  %s4 = sld [smem:[#allocation0]]
  $region22: #{tpu_custom_call.1} parent=0
    _
  %s6 = ssub.s32 1, %s4
  %s7 = scalar_select 0, %s6, %s4
  $region1: #{tpu_custom_call.1} parent=0
    #allocation2 [shape = 'u8[4096]{0}', space=vmem, size = 0x1000, scoped, tag = 'output window, operand 0, single buffered']
    #allocation3 [shape = 's32[1]{0}', space=sflag, size = 0x4, scoped, tag = 'scoped memory for tpu_custom_call.1']
    %8 = vsyncpa [#allocation3], 0
    // Predicated region
    $region2: #{tpu_custom_call.1} parent=1 // pred_check
      _
    $region3: #{tpu_custom_call.1} parent=1 // pred_check_branch
      %10 = sbr.rel (0) target = $region5
    $region4: #{tpu_custom_call.1} parent=1 // pred_region
      _
    $region5: #{tpu_custom_call.1} parent=1 // pred_fallthru
      _
    // Predicated region
    $region6: #{tpu_custom_call.1} parent=1 // pred_check
      _
    $region7: #{tpu_custom_call.1} parent=1 // pred_check_branch
      %12 = sbr.rel (0) target = $region9
    $region8: #{tpu_custom_call.1} parent=1 // pred_region
      _
    $region9: #{tpu_custom_call.1} parent=1 // pred_fallthru
      _
    // Predicated region
    $region10: #{tpu_custom_call.1} parent=1 // pred_check
      _
    $region11: #{tpu_custom_call.1} parent=1 // pred_check_branch
      %14 = sbr.rel (0) target = $region13
    $region12: #{tpu_custom_call.1} parent=1 // pred_region
      _
    $region13: #{tpu_custom_call.1} parent=1 // pred_fallthru
      _
    %v15 = vld [vmem:[%s0] sm:$0xff]
    %v16 = vld [vmem:[%s1] sm:$0xff]
    %v17 = vld [vmem:[%s1 + $0x8] sm:$0xff]
    %v18 = vld [vmem:[%s1 + $0x10] sm:$0x3f]
    %v19 = vld [vmem:[%s2] sm:$0x1]
    %v21 = vperm.slane %v19, 0
    %vm23 = vcmask 179200
    %v25 = vsel %vm23, %v15, 0
    %vm27 = vcmask 1045504
    %v29 = vsel %vm27, %v18, 0
    %31 = vmatpush.msra.mxu0 0.0
    %32 = vmatpush.msra.mxu0 0.0
    %33 = vmatpush.msra.mxu0 0.0
    %34 = vmatpush.msra.mxu0 0.0
    %35 = vmatpush.msra.mxu0 0.0
    %36 = vmatpush.msra.mxu0 0.0
    %37 = vmatpush.msra.mxu0 0.0
    %38 = vmatpush.msra.mxu0 0.0
    %39 = vmatpush.msra.mxu0 0.0
    %40 = vmatpush.msra.mxu0 0.0
    %41 = vmatpush.msra.mxu0 0.0
    %42 = vmatpush.msra.mxu0 0.0
    %43 = vmatpush.msra.mxu0 0.0
    %44 = vmatpush.msra.mxu0 %v29
    %45 = vmatpush.msra.mxu0 %v17
    %46 = vmatpush.msra.mxu0 %v16
    %47 = vmatmul.f32.gmra.mxu0 %v25
    %v48 = vpop.f32.mrf.mxu0
    %v49 = vadd.f32 %v21, %v48
    %50 = vdwg.mxu0
    %vm51 = vcmask 64512
    %52 = vst.msk [vmem:[#allocation2] sm:$0xff] %vm51, %v49
    // Predicated region
    $region14: #{tpu_custom_call.1} parent=1 // pred_check
      _
    $region15: #{tpu_custom_call.1} parent=1 // pred_check_branch
      %54 = sbr.rel (0) target = $region17
    $region16: #{tpu_custom_call.1} parent=1 // pred_region
      %56 = vsyncadd [#allocation3], 0
      %s58 = sshll.u32 [#allocation2], 4
      %s59 = int_to_ptr.vmem [resolvable:$true] %s58
      %s60 = sshll.u32 %s3, 4
      %s61 = int_to_ptr.hbm [resolvable:$true] %s60
      %63 = dma.vmem_to_hbm [thread:$0]  %s59, 128, %s61, [#allocation3]
    $region17: #{tpu_custom_call.1} parent=1 // pred_fallthru
      _
    // Predicated region
    $region18: #{tpu_custom_call.1} parent=1 // pred_check
      _
    $region19: #{tpu_custom_call.1} parent=1 // pred_check_branch
      %65 = sbr.rel (0) target = $region21
    $region20: #{tpu_custom_call.1} parent=1 // pred_region
      %67 = dma.done [#allocation3], 128
    $region21: #{tpu_custom_call.1} parent=1 // pred_fallthru
      _
    %68 = vsyncpa [#allocation3], 1

</llo_original>
